<compile_context>
chip_gen: v5e
topology: v5e:2x2
jax: 0.10.0
libtpu: 0.0.40
codegen_flags: <defaults>
</compile_context>

<pallas_src>
import jax
import jax.numpy as jnp
import numpy as np
from jax.experimental import pallas as pl
from jax.experimental.pallas import tpu as pltpu


def pos_embed_kernel(wpos_ref, out_ref):
    # wpos_ref: (tile_s, D)         -- one seq tile of W_pos
    # out_ref : (tile_b, tile_s, D) -- same tile broadcast across a batch sub-block
    out_ref[...] = jnp.broadcast_to(wpos_ref[...][None, :, :], out_ref.shape)


def _pick_tiles(B, S, D, itemsize, budget_bytes):
    """Largest (seq_tile, batch_tile) whose double-buffered working set fits the budget."""
    seq_cands = [S] + [t for t in (2048, 1024, 512, 256, 128, 64, 32, 16, 8)
                       if t < S and S % t == 0]
    for ts in seq_cands:
        if ts != S and ts % 8 != 0:           # (8,128) rule on second-to-last dims
            continue
        for tb in range(B, 0, -1):
            if B % tb != 0:
                continue
            # input tile + output tile, both double-buffered by the pipeline
            vmem = 2 * (ts * D + tb * ts * D) * itemsize
            if vmem <= budget_bytes:
                return ts, tb
    return (8 if S % 8 == 0 else S), 1        # fallback: smallest legal tile


def pos_embed(tokens, W_pos, *, vmem_budget_bytes=8 << 20):
    """tokens: int[B, S] (only shape used);  W_pos: float[n_ctx, D]  ->  float[B, S, D]."""
    B, S = tokens.shape
    n_ctx, D = W_pos.shape
    assert S <= n_ctx, "sequence length exceeds n_ctx"
    itemsize = jnp.dtype(W_pos.dtype).itemsize

    tile_s, tile_b = _pick_tiles(B, S, D, itemsize, vmem_budget_bytes)

    # If the single seq block is ragged w.r.t. the (8,128) rule, pre-slice W_pos so
    # the block equals the full array extent (static slice, layout plumbing only).
    wpos_in = W_pos
    if tile_s == S and (S % 8 != 0) and (S != n_ctx):
        wpos_in = W_pos[:S]

    grid = (S // tile_s, B // tile_b)   # batch is innermost -> W_pos DMA reused across it

    return pl.pallas_call(
        pos_embed_kernel,
        out_shape=jax.ShapeDtypeStruct((B, S, D), W_pos.dtype),
        grid=grid,
        in_specs=[
            # s-th seq tile of W_pos; block index invariant in b (fast axis), so the
            # pipeline skips redundant input DMAs while b iterates.
            pl.BlockSpec((tile_s, D), lambda s, b: (s, 0)),
        ],
        out_specs=pl.BlockSpec((tile_b, tile_s, D), lambda s, b: (b, s, 0)),
        compiler_params=pltpu.CompilerParams(
            dimension_semantics=("parallel", "parallel"),
        ),
    )(wpos_in)


# ---------------- pure-JAX reference ----------------
def reference_pos_embed(tokens, W_pos):
    B, S = tokens.shape
    return jnp.broadcast_to(W_pos[:S][None, :, :], (B, S, W_pos.shape[1]))


if __name__ == "__main__":
    # Small shapes consistent with the module: batch=2, seq=8, d_model=128, n_ctx=64.
    B, S, D, N_CTX = 2, 8, 128, 64
    init_range = 0.02

    key = jax.random.PRNGKey(0)
    k_w, k_t = jax.random.split(key)
    W_pos = init_range * jax.random.normal(k_w, (N_CTX, D), jnp.float32)
    tokens = jax.random.randint(k_t, (B, S), 0, 1000, dtype=jnp.int32)

    out = jax.block_until_ready(pos_embed(tokens, W_pos))
    ref = jax.block_until_ready(reference_pos_embed(tokens, W_pos))
    np.testing.assert_allclose(np.asarray(out), np.asarray(ref), atol=0.0, rtol=0.0)
    assert out.shape == (B, S, D)

    # Also exercise the tiled (grid > 1) path by forcing a tiny VMEM budget.
    B2, S2 = 4, 32
    tokens2 = jax.random.randint(k_t, (B2, S2), 0, 1000, dtype=jnp.int32)
    out2 = jax.block_until_ready(pos_embed(tokens2, W_pos, vmem_budget_bytes=64 << 10))
    ref2 = reference_pos_embed(tokens2, W_pos)
    np.testing.assert_allclose(np.asarray(out2), np.asarray(ref2), atol=0.0, rtol=0.0)

    print("KERNEL_OK")
</pallas_src>

<mosaic_0001>
module attributes {stable_mosaic.version = 11 : i64} {
  func.func @pos_embed_kernel(%arg0: i32, %arg1: i32, %arg2: memref<8x128xf32, #tpu.memory_space<vmem>>, %arg3: memref<2x8x128xf32, #tpu.memory_space<vmem>>) attributes {dimension_semantics = [#tpu.dimension_semantics<parallel>, #tpu.dimension_semantics<parallel>], iteration_bounds = array<i64: 1, 1>, scalar_prefetch = 0 : i64, scratch_operands = 0 : i64, tpu.core_type = #tpu.core_type<tc>, window_params = [{transform_indices = @transform_0, window_bounds = array<i64: 8, 128>}, {transform_indices = @transform_1, window_bounds = array<i64: 2, 8, 128>}]} {
    %c0 = arith.constant 0 : index
    %c0_0 = arith.constant 0 : index
    %0 = vector.load %arg2[%c0, %c0_0] : memref<8x128xf32, #tpu.memory_space<vmem>>, vector<8x128xf32>
    %1 = vector.shape_cast %0 : vector<8x128xf32> to vector<1x8x128xf32>
    %2 = vector.shape_cast %1 : vector<1x8x128xf32> to vector<1x8x128xf32>
    %3 = vector.broadcast %2 : vector<1x8x128xf32> to vector<2x8x128xf32>
    %c0_1 = arith.constant 0 : index
    %c0_2 = arith.constant 0 : index
    %c0_3 = arith.constant 0 : index
    %4 = vector.load %arg3[%c0_1, %c0_2, %c0_3] : memref<2x8x128xf32, #tpu.memory_space<vmem>>, vector<2x8x128xf32>
    tpu.vector_store %arg3[%c0_1, %c0_2, %c0_3], %3 {strides = array<i32>} : memref<2x8x128xf32, #tpu.memory_space<vmem>>, vector<2x8x128xf32>,
    return
  }
  func.func @transform_0(%arg0: i32, %arg1: i32) -> (i32, i32) {
    %c0_i32 = arith.constant 0 : i32
    %c0_i32_0 = arith.constant 0 : i32
    return %arg0, %c0_i32 : i32, i32
  }
  func.func @transform_1(%arg0: i32, %arg1: i32) -> (i32, i32, i32) {
    %c0_i32 = arith.constant 0 : i32
    %c0_i32_0 = arith.constant 0 : i32
    return %arg1, %arg0, %c0_i32 : i32, i32, i32
  }
}

</mosaic_0001>

<llo_original>
// kernel: tpu_custom_call.1
$region0: #{tpu_custom_call.1}
  #allocation0 [shape = 'u32[]', space=smem, size = 0x4, offset = 0x4, fixed_abs, tag = 'smem constant byte address 0x4 - core index']
  #allocation1 [shape = 'u32[72,128]{1,0:T(1,128)}', space=vmem, size = 0x9000, scoped, tag = 'internal scratch']
  %s0 = inlined_call_operand.hbm [shape: f32[64,128], index: 0, kind: input, shape index: {}]
  %s1 = inlined_call_operand.hbm [shape: f32[2,8,128], index: 1, kind: output, shape index: {}]
  %s2 = sld [smem:[#allocation0]]
  $region18: #{tpu_custom_call.1} parent=0
    _
  %s4 = ssub.s32 1, %s2
  %s5 = scalar_select 0, %s4, %s2
  $region1: #{tpu_custom_call.1} parent=0
    #allocation2 [shape = 'u8[4096]{0}', space=vmem, size = 0x1000, scoped, tag = 'input window, operand 0, single buffered']
    #allocation3 [shape = 's32[1]{0}', space=sflag, size = 0x4, scoped, tag = 'scoped memory for tpu_custom_call.1']
    #allocation4 [shape = 's32[1]{0}', space=sflag, size = 0x4, scoped, tag = 'scoped memory for tpu_custom_call.1']
    #allocation5 [shape = 'u8[8192]{0}', space=vmem, size = 0x2000, scoped, tag = 'output window, operand 0, single buffered']
    %6 = vsyncpa [#allocation3], 0
    %7 = vsyncpa [#allocation4], 0
    // Predicated region
    $region2: #{tpu_custom_call.1} parent=1 // pred_check
      _
    $region3: #{tpu_custom_call.1} parent=1 // pred_check_branch
      %9 = sbr.rel (0) target = $region5
    $region4: #{tpu_custom_call.1} parent=1 // pred_region
      %11 = vsyncadd [#allocation3], 0
      %s13 = sshll.u32 %s0, 4
      %s14 = int_to_ptr.hbm [resolvable:$true] %s13
      %s15 = sshll.u32 [#allocation2], 4
      %s16 = int_to_ptr.vmem [resolvable:$true] %s15
      %18 = dma.hbm_to_vmem [thread:$0]  %s14, 128, %s16, [#allocation3]
    $region5: #{tpu_custom_call.1} parent=1 // pred_fallthru
      _
    // Predicated region
    $region6: #{tpu_custom_call.1} parent=1 // pred_check
      _
    $region7: #{tpu_custom_call.1} parent=1 // pred_check_branch
      %20 = sbr.rel (0) target = $region9
    $region8: #{tpu_custom_call.1} parent=1 // pred_region
      %22 = dma.done [#allocation3], 128
    $region9: #{tpu_custom_call.1} parent=1 // pred_fallthru
      _
    %v23 = vld [vmem:[#allocation2] sm:$0xff]
    %24 = vst [vmem:[#allocation5] sm:$0xff] %v23
    %25 = vst [vmem:[#allocation5 + $0x8] sm:$0xff] %v23
    // Predicated region
    $region10: #{tpu_custom_call.1} parent=1 // pred_check
      _
    $region11: #{tpu_custom_call.1} parent=1 // pred_check_branch
      %27 = sbr.rel (0) target = $region13
    $region12: #{tpu_custom_call.1} parent=1 // pred_region
      %29 = vsyncadd [#allocation4], 0
      %s30 = sshll.u32 [#allocation5], 4
      %s31 = int_to_ptr.vmem [resolvable:$true] %s30
      %s32 = sshll.u32 %s1, 4
      %s33 = int_to_ptr.hbm [resolvable:$true] %s32
      %38 = dma.vmem_to_hbm [thread:$0]  %s31, 256, %s33, [#allocation4], 128, 128, 8
    $region13: #{tpu_custom_call.1} parent=1 // pred_fallthru
      _
    // Predicated region
    $region14: #{tpu_custom_call.1} parent=1 // pred_check
      _
    $region15: #{tpu_custom_call.1} parent=1 // pred_check_branch
      %40 = sbr.rel (0) target = $region17
    $region16: #{tpu_custom_call.1} parent=1 // pred_region
      %42 = dma.done [#allocation4], 256
    $region17: #{tpu_custom_call.1} parent=1 // pred_fallthru
      _
    %43 = vsyncpa [#allocation3], 1
    %44 = vsyncpa [#allocation4], 1

</llo_original>
